<compile_context>
chip_gen: v7x
topology: tpu7x:2x2x1
jax: 0.10.0
libtpu: 0.0.40
codegen_flags: <defaults>
</compile_context>

<pallas_src>
import functools
import math

import jax
import jax.numpy as jnp
from jax import lax
from jax.experimental import pallas as pl
from jax.experimental.pallas import tpu as pltpu


def _round_up(x, m):
    return ((x + m - 1) // m) * m


def _vmem_capacity_bytes():
    """Generation-aware VMEM capacity (v5e/v6e: 128 MiB, v7x: 64 MiB per TC)."""
    try:
        info = pltpu.get_tpu_info()
        cap = getattr(info, "vmem_capacity_bytes", None)
        if cap:
            return int(cap)
    except Exception:
        pass
    return 64 * 1024 * 1024  # conservative (v7x-sized) fallback


# ---------------------------------------------------------------------------
# Kernel 1: fused Q/K projection.
#   One (tp, K) x (K, 2*Dqp) MXU matmul per row tile (Wq|Wk concatenated on
#   the host), f32 accumulation, f32 bias add, 1/sqrt(K) folded into the Q
#   half, halves stored separately via a 128-aligned static lane slice.
# ---------------------------------------------------------------------------
def _proj_kernel(x_ref, w_ref, b_ref, q_ref, k_ref, *, scale, dqp):
    qk = jnp.dot(x_ref[...], w_ref[...],
                 preferred_element_type=jnp.float32) + b_ref[...]
    q_ref[...] = (qk[:, :dqp] * scale).astype(q_ref.dtype)
    k_ref[...] = qk[:, dqp:].astype(k_ref.dtype)


# ---------------------------------------------------------------------------
# Kernel 2 (plans "full_row" and "tiled"): logits for one Q tile against the
# provided K block. Feature dims of both operands contracted directly.
# ---------------------------------------------------------------------------
def _logits_kernel(q_ref, k_ref, o_ref):
    o_ref[0] = lax.dot_general(
        q_ref[0], k_ref[0],
        dimension_numbers=(((1,), (1,)), ((), ())),
        preferred_element_type=jnp.float32,
    ).astype(o_ref.dtype)


# ---------------------------------------------------------------------------
# Kernel 2 (plan "resident"): whole projected K of the current batch stays
# resident in VMEM (constant block index over i, j); the tk chunk for this
# grid step is sliced in-kernel.
# ---------------------------------------------------------------------------
def _logits_resident_kernel(q_ref, k_ref, o_ref, *, tk):
    j = pl.program_id(2)
    start = pl.multiple_of(j * tk, tk)
    k_chunk = k_ref[0, pl.ds(start, tk), :]
    o_ref[0] = lax.dot_general(
        q_ref[0], k_chunk,
        dimension_numbers=(((1,), (1,)), ((), ())),
        preferred_element_type=jnp.float32,
    ).astype(o_ref.dtype)


def _choose_proj_tile(n_rows, K, Dqp, x_it, w_it, proj_it, budget):
    for tp in (512, 256, 128):
        if tp > n_rows or n_rows % tp:
            continue
        cost = (2 * tp * K * x_it            # x tile (double-buffered)
                + 2 * K * 2 * Dqp * w_it     # fused weight panel
                + 2 * 2 * Dqp * 4            # fused bias
                + 2 * 2 * tp * Dqp * proj_it)  # Q/K output tiles
        if cost <= budget:
            return tp
    return 128


def _choose_logits_plan(Tp, Dqp, proj_it, out_it, budget):
    # Plan A: K resident per batch + full logits rows (lane-dense stores).
    for tq in (512, 256, 128):
        if tq > Tp or Tp % tq:
            continue
        cost = 2 * tq * Dqp * proj_it + 2 * Tp * Dqp * proj_it + 2 * tq * Tp * out_it
        if cost <= budget:
            return ("full_row", tq, Tp)
    # Plan B: K resident per batch, tk-tiled output (wide lane axis preferred).
    for tq in (256, 128):
        if tq > Tp or Tp % tq:
            continue
        for tk in (2048, 1024, 512, 256, 128):
            if tk > Tp or Tp % tk:
                continue
            cost = (2 * tq * Dqp * proj_it + 2 * Tp * Dqp * proj_it
                    + 2 * tq * tk * out_it)
            if cost <= budget:
                return ("resident", tq, tk)
    # Plan C: fully tiled Q and K (very large T on small-VMEM parts).
    for tq in (256, 128):
        if tq > Tp or Tp % tq:
            continue
        for tk in (2048, 1024, 512, 256, 128):
            if tk > Tp or Tp % tk:
                continue
            cost = (2 * tq * Dqp * proj_it + 2 * tk * Dqp * proj_it
                    + 2 * tq * tk * out_it)
            if cost <= budget:
                return ("tiled", tq, tk)
    return ("tiled", 128, 128)


def self_attention(x, weights_q, bias_q, weights_k, bias_k, *,
                   use_bf16=False, out_dtype=jnp.float32, force_pallas=False):
    """Scaled attention logits matching PyTorch SelfAttention.forward.

    x: (B, T, K) f32; weights_[qk]: (K, Dq); bias_[qk]: (Dq,).
    Returns (B, T, T) in out_dtype (default f32, exact PyTorch semantics).
    """
    B, T, K = x.shape
    Kw, Dq = weights_q.shape
    assert K == Kw, "Input feature dimension does not match data_dim"
    scale = 1.0 / math.sqrt(K)

    # Small-problem bypass: padding tiny problems to 128 and paying two
    # pallas_call fixed costs is slower than plain XLA.
    if not force_pallas and T < 128:
        q = jnp.matmul(x, weights_q) + bias_q
        k = jnp.matmul(x, weights_k) + bias_k
        dot = jnp.einsum("btd,bsd->bts", q, k)
        return (dot * scale).astype(out_dtype)

    # --- host-side prep: pad to lane-dense multiples of 128, fuse Wq|Wk ---
    Dqp = max(128, _round_up(Dq, 128))
    Tp = max(128, _round_up(T, 128))

    if Dqp != Dq:
        pad_w = [(0, 0), (0, Dqp - Dq)]
        weights_q = jnp.pad(weights_q, pad_w)
        weights_k = jnp.pad(weights_k, pad_w)
        bias_q = jnp.pad(bias_q, [(0, Dqp - Dq)])
        bias_k = jnp.pad(bias_k, [(0, Dqp - Dq)])
    wqk = jnp.concatenate([weights_q, weights_k], axis=1)        # (K, 2*Dqp)
    bqk = jnp.concatenate([bias_q, bias_k]).reshape(1, 2 * Dqp)  # (1, 2*Dqp)

    if Tp != T:
        x = jnp.pad(x, [(0, 0), (0, Tp - T), (0, 0)])

    proj_dtype = jnp.bfloat16 if use_bf16 else jnp.float32
    proj_it = 2 if use_bf16 else 4
    out_it = jnp.dtype(out_dtype).itemsize
    if use_bf16:
        # Feed the MXU bf16 operands (and halve x/W DMA); f32 accumulation.
        x = x.astype(jnp.bfloat16)
        wqk = wqk.astype(jnp.bfloat16)
    xw_it = proj_it

    x_rows = x.reshape(B * Tp, K)

    cap = _vmem_capacity_bytes()
    vmem_limit = int(cap * 0.75)
    budget = int(cap * 0.60)

    # ---------------- Kernel 1: fused Q/K projection ----------------
    n_rows = B * Tp
    tp = _choose_proj_tile(n_rows, K, Dqp, xw_it, xw_it, proj_it, budget)
    q_rows, k_rows = pl.pallas_call(
        functools.partial(_proj_kernel, scale=scale, dqp=Dqp),
        out_shape=(
            jax.ShapeDtypeStruct((n_rows, Dqp), proj_dtype),
            jax.ShapeDtypeStruct((n_rows, Dqp), proj_dtype),
        ),
        grid_spec=pltpu.PrefetchScalarGridSpec(
            num_scalar_prefetch=0,
            grid=(n_rows // tp,),
            in_specs=[
                pl.BlockSpec((tp, K), lambda i: (i, 0)),         # x row tile
                pl.BlockSpec((K, 2 * Dqp), lambda i: (0, 0)),    # Wq|Wk (resident)
                pl.BlockSpec((1, 2 * Dqp), lambda i: (0, 0)),    # bq|bk (resident)
            ],
            out_specs=(
                pl.BlockSpec((tp, Dqp), lambda i: (i, 0)),
                pl.BlockSpec((tp, Dqp), lambda i: (i, 0)),
            ),
        ),
        compiler_params=pltpu.CompilerParams(
            dimension_semantics=("parallel",),
            vmem_limit_bytes=vmem_limit,
        ),
        cost_estimate=pl.CostEstimate(
            flops=2 * n_rows * K * 2 * Dqp,
            transcendentals=0,
            bytes_accessed=(n_rows * K * xw_it
                            + K * 2 * Dqp * xw_it
                            + 2 * Dqp * 4
                            + 2 * n_rows * Dqp * proj_it),
        ),
    )(x_rows, wqk, bqk)
    q_proj = q_rows.reshape(B, Tp, Dqp)
    k_proj = k_rows.reshape(B, Tp, Dqp)

    # ---------------- Kernel 2: tiled logits Q K^T ----------------
    plan, tq, tk = _choose_logits_plan(Tp, Dqp, proj_it, out_it, budget)
    logits_cost = pl.CostEstimate(
        flops=2 * B * Tp * Tp * Dqp,
        transcendentals=0,
        bytes_accessed=2 * B * Tp * Dqp * proj_it + B * Tp * Tp * out_it,
    )

    if plan == "full_row":
        logits_p = pl.pallas_call(
            _logits_kernel,
            out_shape=jax.ShapeDtypeStruct((B, Tp, Tp), out_dtype),
            grid_spec=pltpu.PrefetchScalarGridSpec(
                num_scalar_prefetch=0,
                grid=(B, Tp // tq),
                in_specs=[
                    pl.BlockSpec((1, tq, Dqp), lambda b, i: (b, i, 0)),  # Q tile
                    pl.BlockSpec((1, Tp, Dqp), lambda b, i: (b, 0, 0)),  # K resident
                ],
                out_specs=pl.BlockSpec((1, tq, Tp), lambda b, i: (b, i, 0)),
            ),
            compiler_params=pltpu.CompilerParams(
                dimension_semantics=("parallel", "parallel"),
                vmem_limit_bytes=vmem_limit,
            ),
            cost_estimate=logits_cost,
        )(q_proj, k_proj)
    elif plan == "resident":
        logits_p = pl.pallas_call(
            functools.partial(_logits_resident_kernel, tk=tk),
            out_shape=jax.ShapeDtypeStruct((B, Tp, Tp), out_dtype),
            grid_spec=pltpu.PrefetchScalarGridSpec(
                num_scalar_prefetch=0,
                grid=(B, Tp // tq, Tp // tk),
                in_specs=[
                    pl.BlockSpec((1, tq, Dqp), lambda b, i, j: (b, i, 0)),
                    pl.BlockSpec((1, Tp, Dqp), lambda b, i, j: (b, 0, 0)),  # resident
                ],
                out_specs=pl.BlockSpec((1, tq, tk), lambda b, i, j: (b, i, j)),
            ),
            compiler_params=pltpu.CompilerParams(
                dimension_semantics=("parallel", "parallel", "arbitrary"),
                vmem_limit_bytes=vmem_limit,
            ),
            cost_estimate=logits_cost,
        )(q_proj, k_proj)
    else:  # "tiled"
        logits_p = pl.pallas_call(
            _logits_kernel,
            out_shape=jax.ShapeDtypeStruct((B, Tp, Tp), out_dtype),
            grid_spec=pltpu.PrefetchScalarGridSpec(
                num_scalar_prefetch=0,
                grid=(B, Tp // tq, Tp // tk),
                in_specs=[
                    pl.BlockSpec((1, tq, Dqp), lambda b, i, j: (b, i, 0)),
                    pl.BlockSpec((1, tk, Dqp), lambda b, i, j: (b, j, 0)),
                ],
                out_specs=pl.BlockSpec((1, tq, tk), lambda b, i, j: (b, i, j)),
            ),
            compiler_params=pltpu.CompilerParams(
                dimension_semantics=("parallel", "parallel", "arbitrary"),
                vmem_limit_bytes=vmem_limit,
            ),
            cost_estimate=logits_cost,
        )(q_proj, k_proj)

    if Tp != T:
        logits_p = logits_p[:, :T, :T]
    return logits_p


def _reference(x, weights_q, bias_q, weights_k, bias_k):
    hp = lax.Precision.HIGHEST
    q = jnp.matmul(x, weights_q, precision=hp) + bias_q
    k = jnp.matmul(x, weights_k, precision=hp) + bias_k
    dot = jnp.einsum("btd,bsd->bts", q, k, precision=hp)
    return dot / math.sqrt(x.shape[-1])


def _make_inputs(key, B, T, K, Dq):
    kx, kwq, kbq, kwk, kbk = jax.random.split(key, 5)
    x = jax.random.normal(kx, (B, T, K), dtype=jnp.float32)
    wq = jax.random.normal(kwq, (K, Dq), dtype=jnp.float32) * 0.1
    bq = jax.random.normal(kbq, (Dq,), dtype=jnp.float32) * 0.1
    wk = jax.random.normal(kwk, (K, Dq), dtype=jnp.float32) * 0.1
    bk = jax.random.normal(kbk, (Dq,), dtype=jnp.float32) * 0.1
    return x, wq, bq, wk, bk


if __name__ == "__main__":
    key = jax.random.PRNGKey(0)
    k1, k2, k3 = jax.random.split(key, 3)

    # --- small shapes consistent with the module: B=2, T=8, K=32, Dq=16 ---
    x, wq, bq, wk, bk = _make_inputs(k1, 2, 8, 32, 16)
    ref = _reference(x, wq, bq, wk, bk)

    # Pallas f32 path (forced, exercises T/Dq padding + slicing).
    out = jax.block_until_ready(
        self_attention(x, wq, bq, wk, bk, force_pallas=True))
    assert out.shape == (2, 8, 8)
    assert jnp.allclose(out, ref, atol=1e-4, rtol=1e-4), "f32 Pallas path mismatch"

    # Pallas bf16 MXU fast path.
    out_bf16 = jax.block_until_ready(
        self_attention(x, wq, bq, wk, bk, use_bf16=True, force_pallas=True))
    assert jnp.allclose(out_bf16, ref, atol=5e-2, rtol=5e-2), "bf16 path mismatch"

    # Small-problem XLA bypass (default for T < 128).
    out_bypass = jax.block_until_ready(self_attention(x, wq, bq, wk, bk))
    assert jnp.allclose(out_bypass, ref, atol=2e-3, rtol=2e-3), "bypass mismatch"

    # --- larger, tile-aligned shapes: no padding, full-row logits plan ---
    x2, wq2, bq2, wk2, bk2 = _make_inputs(k2, 2, 256, 128, 128)
    ref2 = _reference(x2, wq2, bq2, wk2, bk2)
    out2 = jax.block_until_ready(self_attention(x2, wq2, bq2, wk2, bk2))
    assert out2.shape == (2, 256, 256)
    assert jnp.allclose(out2, ref2, atol=2e-3, rtol=2e-3), "large f32 mismatch"

    # Optional bf16 logits output (halves the dominant (B,T,T) HBM write).
    out2_bf16 = jax.block_until_ready(
        self_attention(x2, wq2, bq2, wk2, bk2, out_dtype=jnp.bfloat16))
    assert out2_bf16.dtype == jnp.bfloat16
    assert jnp.allclose(out2_bf16.astype(jnp.float32), ref2,
                        atol=5e-2, rtol=5e-2), "bf16 output mismatch"

    # --- T not a multiple of 128: padded grid + result slicing ---
    x3, wq3, bq3, wk3, bk3 = _make_inputs(k3, 1, 200, 64, 32)
    ref3 = _reference(x3, wq3, bq3, wk3, bk3)
    out3 = jax.block_until_ready(self_attention(x3, wq3, bq3, wk3, bk3))
    assert out3.shape == (1, 200, 200)
    assert jnp.allclose(out3, ref3, atol=2e-3, rtol=2e-3), "non-128 T mismatch"

    print("KERNEL_OK")
</pallas_src>

<mosaic_0001>
module attributes {stable_mosaic.version = 11 : i64} {
  func.func @_proj_kernel(%arg0: i32, %arg1: memref<256x32xf32, #tpu.memory_space<vmem>>, %arg2: memref<32x256xf32, #tpu.memory_space<vmem>>, %arg3: memref<1x256xf32, #tpu.memory_space<vmem>>, %arg4: memref<256x128xf32, #tpu.memory_space<vmem>>, %arg5: memref<256x128xf32, #tpu.memory_space<vmem>>) attributes {dimension_semantics = [#tpu.dimension_semantics<parallel>], iteration_bounds = array<i64: 1>, scalar_prefetch = 0 : i64, scratch_operands = 0 : i64, tpu.core_type = #tpu.core_type<tc>, window_params = [{transform_indices = @transform_0, window_bounds = array<i64: 256, 32>}, {pipeline_mode = #tpu.pipeline_mode<synchronous>, transform_indices = @transform_1, window_bounds = array<i64: 32, 256>}, {pipeline_mode = #tpu.pipeline_mode<synchronous>, transform_indices = @transform_2, window_bounds = array<i64: 1, 256>}, {transform_indices = @transform_3, window_bounds = array<i64: 256, 128>}, {transform_indices = @transform_4, window_bounds = array<i64: 256, 128>}]} {
    %c0 = arith.constant 0 : index
    %c0_0 = arith.constant 0 : index
    %0 = vector.load %arg1[%c0, %c0_0] : memref<256x32xf32, #tpu.memory_space<vmem>>, vector<256x32xf32>
    %c0_1 = arith.constant 0 : index
    %c0_2 = arith.constant 0 : index
    %1 = vector.load %arg2[%c0_1, %c0_2] : memref<32x256xf32, #tpu.memory_space<vmem>>, vector<32x256xf32>
    %cst = arith.constant dense<0.000000e+00> : vector<256x256xf32>
    %2 = tpu.matmul %0, %1, %cst {dimension_numbers = #tpu.dot_dimension_numbers<[1], [0], [0], [1], [0, 0, 1, 1], [], []>} : vector<256x32xf32>, vector<32x256xf32>, vector<256x256xf32> -> vector<256x256xf32>
    %c0_3 = arith.constant 0 : index
    %c0_4 = arith.constant 0 : index
    %3 = vector.load %arg3[%c0_3, %c0_4] : memref<1x256xf32, #tpu.memory_space<vmem>>, vector<1x256xf32>
    %4 = vector.broadcast %3 : vector<1x256xf32> to vector<256x256xf32>
    %5 = arith.addf %2, %4 : vector<256x256xf32>
    %6 = vector.extract_strided_slice %5 {offsets = [0, 0], sizes = [256, 128], strides = [1, 1]} : vector<256x256xf32> to vector<256x128xf32>
    %cst_5 = arith.constant 0.176776692 : f32
    %7 = vector.broadcast %cst_5 : f32 to vector<256x128xf32>
    %8 = arith.mulf %6, %7 : vector<256x128xf32>
    %c0_6 = arith.constant 0 : index
    %c0_7 = arith.constant 0 : index
    %9 = vector.load %arg4[%c0_6, %c0_7] : memref<256x128xf32, #tpu.memory_space<vmem>>, vector<256x128xf32>
    tpu.vector_store %arg4[%c0_6, %c0_7], %8 {strides = array<i32>} : memref<256x128xf32, #tpu.memory_space<vmem>>, vector<256x128xf32>,
    %10 = vector.extract_strided_slice %5 {offsets = [0, 128], sizes = [256, 128], strides = [1, 1]} : vector<256x256xf32> to vector<256x128xf32>
    %c0_8 = arith.constant 0 : index
    %c0_9 = arith.constant 0 : index
    %11 = vector.load %arg5[%c0_8, %c0_9] : memref<256x128xf32, #tpu.memory_space<vmem>>, vector<256x128xf32>
    tpu.vector_store %arg5[%c0_8, %c0_9], %10 {strides = array<i32>} : memref<256x128xf32, #tpu.memory_space<vmem>>, vector<256x128xf32>,
    return
  }
  func.func @transform_0(%arg0: i32) -> (i32, i32) {
    %c0_i32 = arith.constant 0 : i32
    %c0_i32_0 = arith.constant 0 : i32
    return %arg0, %c0_i32 : i32, i32
  }
  func.func @transform_1(%arg0: i32) -> (i32, i32) {
    %c0_i32 = arith.constant 0 : i32
    %c0_i32_0 = arith.constant 0 : i32
    %c0_i32_1 = arith.constant 0 : i32
    return %c0_i32, %c0_i32_0 : i32, i32
  }
  func.func @transform_2(%arg0: i32) -> (i32, i32) {
    %c0_i32 = arith.constant 0 : i32
    %c0_i32_0 = arith.constant 0 : i32
    %c0_i32_1 = arith.constant 0 : i32
    return %c0_i32, %c0_i32_0 : i32, i32
  }
  func.func @transform_3(%arg0: i32) -> (i32, i32) {
    %c0_i32 = arith.constant 0 : i32
    %c0_i32_0 = arith.constant 0 : i32
    return %arg0, %c0_i32 : i32, i32
  }
  func.func @transform_4(%arg0: i32) -> (i32, i32) {
    %c0_i32 = arith.constant 0 : i32
    %c0_i32_0 = arith.constant 0 : i32
    return %arg0, %c0_i32 : i32, i32
  }
}

</mosaic_0001>

<llo_original>
// kernel: tpu_custom_call.1
$region0: #{tpu_custom_call.1}
  #allocation0 [shape = 'u32[]', space=smem, size = 0x4, offset = 0x4, fixed_abs, tag = 'smem constant byte address 0x4 - core index']
  #allocation1 [shape = 'u32[144,128]{1,0:T(1,128)}', space=vmem, size = 0x12000, scoped, tag = 'internal scratch']
  %s0 = inlined_call_operand.vmem [shape: f32[256,32], index: 0, kind: input, shape index: {}]
  %s1 = inlined_call_operand.vmem [shape: f32[32,256], index: 1, kind: input, shape index: {}]
  %s2 = inlined_call_operand.vmem [shape: f32[1,256], index: 2, kind: input, shape index: {}]
  %s3 = inlined_call_operand.hbm [shape: f32[256,128], index: 3, kind: output, shape index: {0}]
  %s4 = inlined_call_operand.hbm [shape: f32[256,128], index: 4, kind: output, shape index: {1}]
  %5 = xla_tuple %s3, %s4
  %s6 = sld [smem:[#allocation0]]
  $region30: #{tpu_custom_call.1} parent=0
    _
  %s8 = ssub.s32 1, %s6
  %s9 = scalar_select 0, %s8, %s6
  $region1: #{tpu_custom_call.1} parent=0
    #allocation2 [shape = 'u8[131072]{0}', space=vmem, size = 0x20000, scoped, tag = 'output window, operand 0, single buffered']
    #allocation3 [shape = 's32[1]{0}', space=sflag, size = 0x4, scoped, tag = 'scoped memory for tpu_custom_call.1']
    #allocation4 [shape = 'u8[131072]{0}', space=vmem, size = 0x20000, scoped, tag = 'output window, operand 1, single buffered']
    #allocation5 [shape = 's32[1]{0}', space=sflag, size = 0x4, scoped, tag = 'scoped memory for tpu_custom_call.1']
    %10 = vsyncpa [#allocation3], 0
    %11 = vsyncpa [#allocation5], 0
    // Predicated region
    $region2: #{tpu_custom_call.1} parent=1 // pred_check
      _
    $region3: #{tpu_custom_call.1} parent=1 // pred_check_branch
      %13 = sbr.rel (0) target = $region5
    $region4: #{tpu_custom_call.1} parent=1 // pred_region
      _
    $region5: #{tpu_custom_call.1} parent=1 // pred_fallthru
      _
    // Predicated region
    $region6: #{tpu_custom_call.1} parent=1 // pred_check
      _
    $region7: #{tpu_custom_call.1} parent=1 // pred_check_branch
      %15 = sbr.rel (0) target = $region9
    $region8: #{tpu_custom_call.1} parent=1 // pred_region
      _
    $region9: #{tpu_custom_call.1} parent=1 // pred_fallthru
      _
    // Predicated region
    $region10: #{tpu_custom_call.1} parent=1 // pred_check
      _
    $region11: #{tpu_custom_call.1} parent=1 // pred_check_branch
      %17 = sbr.rel (0) target = $region13
    $region12: #{tpu_custom_call.1} parent=1 // pred_region
      _
    $region13: #{tpu_custom_call.1} parent=1 // pred_fallthru
      _
    %v18 = vld [vmem:[%s0] sm:$0xff]
    %v19 = vld [vmem:[%s0 + $0x8] sm:$0xff]
    %v20 = vld [vmem:[%s0 + $0x10] sm:$0xff]
    %v21 = vld [vmem:[%s0 + $0x18] sm:$0xff]
    %v22 = vld [vmem:[%s0 + $0x20] sm:$0xff]
    %v23 = vld [vmem:[%s0 + $0x28] sm:$0xff]
    %v24 = vld [vmem:[%s0 + $0x30] sm:$0xff]
    %v25 = vld [vmem:[%s0 + $0x38] sm:$0xff]
    %v26 = vld [vmem:[%s0 + $0x40] sm:$0xff]
    %v27 = vld [vmem:[%s0 + $0x48] sm:$0xff]
    %v28 = vld [vmem:[%s0 + $0x50] sm:$0xff]
    %v29 = vld [vmem:[%s0 + $0x58] sm:$0xff]
    %v30 = vld [vmem:[%s0 + $0x60] sm:$0xff]
    %v31 = vld [vmem:[%s0 + $0x68] sm:$0xff]
    %v32 = vld [vmem:[%s0 + $0x70] sm:$0xff]
    %v33 = vld [vmem:[%s0 + $0x78] sm:$0xff]
    %v34 = vld [vmem:[%s0 + $0x80] sm:$0xff]
    %v35 = vld [vmem:[%s0 + $0x88] sm:$0xff]
    %v36 = vld [vmem:[%s0 + $0x90] sm:$0xff]
    %v37 = vld [vmem:[%s0 + $0x98] sm:$0xff]
    %v38 = vld [vmem:[%s0 + $0xa0] sm:$0xff]
    %v39 = vld [vmem:[%s0 + $0xa8] sm:$0xff]
    %v40 = vld [vmem:[%s0 + $0xb0] sm:$0xff]
    %v41 = vld [vmem:[%s0 + $0xb8] sm:$0xff]
    %v42 = vld [vmem:[%s0 + $0xc0] sm:$0xff]
    %v43 = vld [vmem:[%s0 + $0xc8] sm:$0xff]
    %v44 = vld [vmem:[%s0 + $0xd0] sm:$0xff]
    %v45 = vld [vmem:[%s0 + $0xd8] sm:$0xff]
    %v46 = vld [vmem:[%s0 + $0xe0] sm:$0xff]
    %v47 = vld [vmem:[%s0 + $0xe8] sm:$0xff]
    %v48 = vld [vmem:[%s0 + $0xf0] sm:$0xff]
    %v49 = vld [vmem:[%s0 + $0xf8] sm:$0xff]
    %v50 = vld [vmem:[%s1] sm:$0xff]
    %v51 = vld [vmem:[%s1 + $0x8] sm:$0xff]
    %v52 = vld [vmem:[%s1 + $0x10] sm:$0xff]
    %v53 = vld [vmem:[%s1 + $0x18] sm:$0xff]
    %v54 = vld [vmem:[%s1 + $0x20] sm:$0xff]
    %v55 = vld [vmem:[%s1 + $0x28] sm:$0xff]
    %v56 = vld [vmem:[%s1 + $0x30] sm:$0xff]
    %v57 = vld [vmem:[%s1 + $0x38] sm:$0xff]
    %v58 = vld [vmem:[%s2] sm:$0x3]
    %v60 = vlaneseq
    %v61 = vshrl.u32 %v60, 7
    %v62 = vsub.s32 0, %v61
    %v63 = vrot.slane %v58, %v62
    %v64 = vlaneseq
    %v65 = vshrl.u32 %v64, 7
    %v66 = vsub.s32 1, %v65
    %v67 = vrot.slane %v58, %v66
    %vm70 = vcmask 261120
    %v72 = vsel %vm70, %v18, 0
    %v75 = vsel %vm70, %v19, 0
    %v78 = vsel %vm70, %v20, 0
    %v81 = vsel %vm70, %v21, 0
    %v84 = vsel %vm70, %v22, 0
    %v87 = vsel %vm70, %v23, 0
    %v90 = vsel %vm70, %v24, 0
    %v93 = vsel %vm70, %v25, 0
    %v96 = vsel %vm70, %v26, 0
    %v99 = vsel %vm70, %v27, 0
    %v102 = vsel %vm70, %v28, 0
    %v105 = vsel %vm70, %v29, 0
    %v108 = vsel %vm70, %v30, 0
    %v111 = vsel %vm70, %v31, 0
    %v114 = vsel %vm70, %v32, 0
    %v117 = vsel %vm70, %v33, 0
    %v120 = vsel %vm70, %v34, 0
    %v123 = vsel %vm70, %v35, 0
    %v126 = vsel %vm70, %v36, 0
    %v129 = vsel %vm70, %v37, 0
    %v132 = vsel %vm70, %v38, 0
    %v135 = vsel %vm70, %v39, 0
    %v138 = vsel %vm70, %v40, 0
    %v141 = vsel %vm70, %v41, 0
    %v144 = vsel %vm70, %v42, 0
    %v147 = vsel %vm70, %v43, 0
    %v150 = vsel %vm70, %v44, 0
    %v153 = vsel %vm70, %v45, 0
    %v156 = vsel %vm70, %v46, 0
    %v159 = vsel %vm70, %v47, 0
    %v162 = vsel %vm70, %v48, 0
    %v165 = vsel %vm70, %v49, 0
    %167 = vmatprep.subr.mxu0 %v51
    %168 = vmatpush1.msra.mxu0 %v50
    %169 = vmatprep.subr.mxu0 %v53
    %170 = vmatpush1.msra.mxu0 %v52
    %171 = vmatprep.subr.mxu0 %v55
    %172 = vmatpush1.msra.mxu0 %v54
    %173 = vmatprep.subr.mxu0 %v57
    %174 = vmatpush1.msra.mxu0 %v56
    %175 = vmatprep.subr.mxu0 0.0
    %176 = vmatpush1.msra.mxu0 0.0
    %177 = vmatprep.subr.mxu0 0.0
    %178 = vmatpush1.msra.mxu0 0.0
    %179 = vmatprep.subr.mxu0 0.0
    %180 = vmatpush1.msra.mxu0 0.0
    %181 = vmatprep.subr.mxu0 0.0
    %182 = vmatpush1.msra.mxu0 0.0
    %183 = vmatprep.subr.mxu0 0.0
    %184 = vmatpush1.msra.mxu0 0.0
    %185 = vmatprep.subr.mxu0 0.0
    %186 = vmatpush1.msra.mxu0 0.0
    %187 = vmatprep.subr.mxu0 0.0
    %188 = vmatpush1.msra.mxu0 0.0
    %189 = vmatprep.subr.mxu0 0.0
    %190 = vmatpush1.msra.mxu0 0.0
    %191 = vmatprep.subr.mxu0 0.0
    %192 = vmatpush1.msra.mxu0 0.0
    %193 = vmatprep.subr.mxu0 0.0
    %194 = vmatpush1.msra.mxu0 0.0
    %195 = vmatprep.subr.mxu0 0.0
    %196 = vmatpush1.msra.mxu0 0.0
    %197 = vmatprep.subr.mxu0 0.0
    %198 = vmatpush1.msra.mxu0 0.0
    %199 = vmatprep.subr.mxu0 0.0
    %200 = vmatpush1.msra.mxu0 0.0
    %201 = vmatprep.subr.mxu0 0.0
    %202 = vmatpush1.msra.mxu0 0.0
    %203 = vmatprep.subr.mxu0 0.0
    %204 = vmatpush1.msra.mxu0 0.0
    %205 = vmatprep.subr.mxu0 0.0
    %206 = vmatpush1.msra.mxu0 0.0
    %207 = vmatprep.subr.mxu0 0.0
    %208 = vmatpush1.msra.mxu0 0.0
    %209 = vmatprep.subr.mxu0 0.0
    %210 = vmatpush1.msra.mxu0 0.0
    %211 = vmatprep.subr.mxu0 0.0
    %212 = vmatpush1.msra.mxu0 0.0
    %213 = vmatprep.subr.mxu0 0.0
    %214 = vmatpush1.msra.mxu0 0.0
    %215 = vmatprep.subr.mxu0 0.0
    %216 = vmatpush1.msra.mxu0 0.0
    %217 = vmatprep.subr.mxu0 0.0
    %218 = vmatpush1.msra.mxu0 0.0
    %219 = vmatprep.subr.mxu0 0.0
    %220 = vmatpush1.msra.mxu0 0.0
    %221 = vmatprep.subr.mxu0 0.0
    %222 = vmatpush1.msra.mxu0 0.0
    %223 = vmatprep.subr.mxu0 0.0
    %224 = vmatpush1.msra.mxu0 0.0
    %225 = vmatprep.subr.mxu0 0.0
    %226 = vmatpush1.msra.mxu0 0.0
    %227 = vmatprep.subr.mxu0 0.0
    %228 = vmatpush1.msra.mxu0 0.0
    %229 = vmatprep.subr.mxu0 0.0
    %230 = vmatpush1.msra.mxu0 0.0
    %231 = vmatprep.mubr.f32.mxu0 0.0
    %232 = vmatmul.mubr.f32.gmra.mrb[0].mxu0 %v72
    %v233 = vpop.f32.mrb[0].mxu0
    %v234 = vadd.f32 %v63, %v233
    %v235 = vpop.f32.mrb[0].mxu0
    %v236 = vadd.f32 %v67, %v235
    %237 = vmatprep.mubr.f32.mxu0 0.0
    %238 = vmatmul.mubr.f32.gmra.mrb[0].mxu0 %v75
    %v239 = vpop.f32.mrb[0].mxu0
    %v240 = vadd.f32 %v63, %v239
    %v241 = vpop.f32.mrb[0].mxu0
    %v242 = vadd.f32 %v67, %v241
    %243 = vmatprep.mubr.f32.mxu0 0.0
    %244 = vmatmul.mubr.f32.gmra.mrb[0].mxu0 %v78
    %v245 = vpop.f32.mrb[0].mxu0
    %v246 = vadd.f32 %v63, %v245
    %v247 = vpop.f32.mrb[0].mxu0
    %v248 = vadd.f32 %v67, %v247
    %249 = vmatprep.mubr.f32.mxu0 0.0
    %250 = vmatmul.mubr.f32.gmra.mrb[0].mxu0 %v81
    %v251 = vpop.f32.mrb[0].mxu0
    %v252 = vadd.f32 %v63, %v251
    %v253 = vpop.f32.mrb[0].mxu0
    %v254 = vadd.f32 %v67, %v253
    %255 = vmatprep.mubr.f32.mxu0 0.0
    %256 = vmatmul.mubr.f32.gmra.mrb[0].mxu0 %v84
    %v257 = vpop.f32.mrb[0].mxu0
    %v258 = vadd.f32 %v63, %v257
    %v259 = vpop.f32.mrb[0].mxu0
    %v260 = vadd.f32 %v67, %v259
    %261 = vmatprep.mubr.f32.mxu0 0.0
    %262 = vmatmul.mubr.f32.gmra.mrb[0].mxu0 %v87
    %v263 = vpop.f32.mrb[0].mxu0
    %v264 = vadd.f32 %v63, %v263
    %v265 = vpop.f32.mrb[0].mxu0
    %v266 = vadd.f32 %v67, %v265
    %267 = vmatprep.mubr.f32.mxu0 0.0
    %268 = vmatmul.mubr.f32.gmra.mrb[0].mxu0 %v90
    %v269 = vpop.f32.mrb[0].mxu0
    %v270 = vadd.f32 %v63, %v269
    %v271 = vpop.f32.mrb[0].mxu0
    %v272 = vadd.f32 %v67, %v271
    %273 = vmatprep.mubr.f32.mxu0 0.0
    %274 = vmatmul.mubr.f32.gmra.mrb[0].mxu0 %v93
    %v275 = vpop.f32.mrb[0].mxu0
    %v276 = vadd.f32 %v63, %v275
    %v277 = vpop.f32.mrb[0].mxu0
    %v278 = vadd.f32 %v67, %v277
    %279 = vmatprep.mubr.f32.mxu0 0.0
    %280 = vmatmul.mubr.f32.gmra.mrb[0].mxu0 %v96
    %v281 = vpop.f32.mrb[0].mxu0
    %v282 = vadd.f32 %v63, %v281
    %v283 = vpop.f32.mrb[0].mxu0
    %v284 = vadd.f32 %v67, %v283
    %285 = vmatprep.mubr.f32.mxu0 0.0
    %286 = vmatmul.mubr.f32.gmra.mrb[0].mxu0 %v99
    %v287 = vpop.f32.mrb[0].mxu0
    %v288 = vadd.f32 %v63, %v287
    %v289 = vpop.f32.mrb[0].mxu0
    %v290 = vadd.f32 %v67, %v289
    %291 = vmatprep.mubr.f32.mxu0 0.0
    %292 = vmatmul.mubr.f32.gmra.mrb[0].mxu0 %v102
    %v293 = vpop.f32.mrb[0].mxu0
    %v294 = vadd.f32 %v63, %v293
    %v295 = vpop.f32.mrb[0].mxu0
    %v296 = vadd.f32 %v67, %v295
    %297 = vmatprep.mubr.f32.mxu0 0.0
    %298 = vmatmul.mubr.f32.gmra.mrb[0].mxu0 %v105
    %v299 = vpop.f32.mrb[0].mxu0
    %v300 = vadd.f32 %v63, %v299
    %v301 = vpop.f32.mrb[0].mxu0
    %v302 = vadd.f32 %v67, %v301
    %303 = vmatprep.mubr.f32.mxu0 0.0
    %304 = vmatmul.mubr.f32.gmra.mrb[0].mxu0 %v108
    %v305 = vpop.f32.mrb[0].mxu0
    %v306 = vadd.f32 %v63, %v305
    %v307 = vpop.f32.mrb[0].mxu0
    %v308 = vadd.f32 %v67, %v307
    %309 = vmatprep.mubr.f32.mxu0 0.0
    %310 = vmatmul.mubr.f32.gmra.mrb[0].mxu0 %v111
    %v311 = vpop.f32.mrb[0].mxu0
    %v312 = vadd.f32 %v63, %v311
    %v313 = vpop.f32.mrb[0].mxu0
    %v314 = vadd.f32 %v67, %v313
    %315 = vmatprep.mubr.f32.mxu0 0.0
    %316 = vmatmul.mubr.f32.gmra.mrb[0].mxu0 %v114
    %v317 = vpop.f32.mrb[0].mxu0
    %v318 = vadd.f32 %v63, %v317
    %v319 = vpop.f32.mrb[0].mxu0
    %v320 = vadd.f32 %v67, %v319
    %321 = vmatprep.mubr.f32.mxu0 0.0
    %322 = vmatmul.mubr.f32.gmra.mrb[0].mxu0 %v117
    %v323 = vpop.f32.mrb[0].mxu0
    %v324 = vadd.f32 %v63, %v323
    %v325 = vpop.f32.mrb[0].mxu0
    %v326 = vadd.f32 %v67, %v325
    %327 = vmatprep.mubr.f32.mxu0 0.0
    %328 = vmatmul.mubr.f32.gmra.mrb[0].mxu0 %v120
    %v329 = vpop.f32.mrb[0].mxu0
    %v330 = vadd.f32 %v63, %v329
    %v331 = vpop.f32.mrb[0].mxu0
    %v332 = vadd.f32 %v67, %v331
    %333 = vmatprep.mubr.f32.mxu0 0.0
    %334 = vmatmul.mubr.f32.gmra.mrb[0].mxu0 %v123
    %v335 = vpop.f32.mrb[0].mxu0
    %v336 = vadd.f32 %v63, %v335
    %v337 = vpop.f32.mrb[0].mxu0
    %v338 = vadd.f32 %v67, %v337
    %339 = vmatprep.mubr.f32.mxu0 0.0
    %340 = vmatmul.mubr.f32.gmra.mrb[0].mxu0 %v126
    %v341 = vpop.f32.mrb[0].mxu0
    %v342 = vadd.f32 %v63, %v341
    %v343 = vpop.f32.mrb[0].mxu0
    %v344 = vadd.f32 %v67, %v343
    %345 = vmatprep.mubr.f32.mxu0 0.0
    %346 = vmatmul.mubr.f32.gmra.mrb[0].mxu0 %v129
    %v347 = vpop.f32.mrb[0].mxu0
    %v348 = vadd.f32 %v63, %v347
    %v349 = vpop.f32.mrb[0].mxu0
    %v350 = vadd.f32 %v67, %v349
    %351 = vmatprep.mubr.f32.mxu0 0.0
    %352 = vmatmul.mubr.f32.gmra.mrb[0].mxu0 %v132
    %v353 = vpop.f32.mrb[0].mxu0
    %v354 = vadd.f32 %v63, %v353
    %v355 = vpop.f32.mrb[0].mxu0
    %v356 = vadd.f32 %v67, %v355
    %357 = vmatprep.mubr.f32.mxu0 0.0
    %358 = vmatmul.mubr.f32.gmra.mrb[0].mxu0 %v135
    %v359 = vpop.f32.mrb[0].mxu0
    %v360 = vadd.f32 %v63, %v359
    %v361 = vpop.f32.mrb[0].mxu0
    %v362 = vadd.f32 %v67, %v361
    %363 = vmatprep.mubr.f32.mxu0 0.0
    %364 = vmatmul.mubr.f32.gmra.mrb[0].mxu0 %v138
    %v365 = vpop.f32.mrb[0].mxu0
    %v366 = vadd.f32 %v63, %v365
    %v367 = vpop.f32.mrb[0].mxu0
    %v368 = vadd.f32 %v67, %v367
    %369 = vmatprep.mubr.f32.mxu0 0.0
    %370 = vmatmul.mubr.f32.gmra.mrb[0].mxu0 %v141
    %v371 = vpop.f32.mrb[0].mxu0
    %v372 = vadd.f32 %v63, %v371
    %v373 = vpop.f32.mrb[0].mxu0
    %v374 = vadd.f32 %v67, %v373
    %375 = vmatprep.mubr.f32.mxu0 0.0
    %376 = vmatmul.mubr.f32.gmra.mrb[0].mxu0 %v144
    %v377 = vpop.f32.mrb[0].mxu0
    %v378 = vadd.f32 %v63, %v377
    %v379 = vpop.f32.mrb[0].mxu0
    %v380 = vadd.f32 %v67, %v379
    %381 = vmatprep.mubr.f32.mxu0 0.0
    %382 = vmatmul.mubr.f32.gmra.mrb[0].mxu0 %v147
    %v383 = vpop.f32.mrb[0].mxu0
    %v384 = vadd.f32 %v63, %v383
    %v385 = vpop.f32.mrb[0].mxu0
    %v386 = vadd.f32 %v67, %v385
    %387 = vmatprep.mubr.f32.mxu0 0.0
    %388 = vmatmul.mubr.f32.gmra.mrb[0].mxu0 %v150
    %v389 = vpop.f32.mrb[0].mxu0
    %v390 = vadd.f32 %v63, %v389
    %v391 = vpop.f32.mrb[0].mxu0
    %v392 = vadd.f32 %v67, %v391
    %393 = vmatprep.mubr.f32.mxu0 0.0
    %394 = vmatmul.mubr.f32.gmra.mrb[0].mxu0 %v153
    %v395 = vpop.f32.mrb[0].mxu0
    %v396 = vadd.f32 %v63, %v395
    %v397 = vpop.f32.mrb[0].mxu0
    %v398 = vadd.f32 %v67, %v397
    %399 = vmatprep.mubr.f32.mxu0 0.0
    %400 = vmatmul.mubr.f32.gmra.mrb[0].mxu0 %v156
    %v401 = vpop.f32.mrb[0].mxu0
    %v402 = vadd.f32 %v63, %v401
    %v403 = vpop.f32.mrb[0].mxu0
    %v404 = vadd.f32 %v67, %v403
    %405 = vmatprep.mubr.f32.mxu0 0.0
    %406 = vmatmul.mubr.f32.gmra.mrb[0].mxu0 %v159
    %v407 = vpop.f32.mrb[0].mxu0
    %v408 = vadd.f32 %v63, %v407
    %v409 = vpop.f32.mrb[0].mxu0
    %v410 = vadd.f32 %v67, %v409
    %411 = vmatprep.mubr.f32.mxu0 0.0
    %412 = vmatmul.mubr.f32.gmra.mrb[0].mxu0 %v162
    %v413 = vpop.f32.mrb[0].mxu0
    %v414 = vadd.f32 %v63, %v413
    %v415 = vpop.f32.mrb[0].mxu0
    %v416 = vadd.f32 %v67, %v415
    %417 = vmatprep.mubr.f32.mxu0 0.0
    %418 = vmatmul.mubr.f32.gmra.mrb[0].mxu0 %v165
    %v419 = vpop.f32.mrb[0].mxu0
    %v420 = vadd.f32 %v63, %v419
    %v421 = vpop.f32.mrb[0].mxu0
    %v422 = vadd.f32 %v67, %v421
    %423 = vdwg.mxu0
    %v424 = vmul.f32 %v234, 0.17677669
    %v425 = vmul.f32 %v240, 0.17677669
    %v426 = vmul.f32 %v246, 0.17677669
    %v427 = vmul.f32 %v252, 0.17677669
    %v428 = vmul.f32 %v258, 0.17677669
    %v429 = vmul.f32 %v264, 0.17677669
    %v430 = vmul.f32 %v270, 0.17677669
    %v431 = vmul.f32 %v276, 0.17677669
    %v432 = vmul.f32 %v282, 0.17677669
    %v433 = vmul.f32 %v288, 0.17677669
    %v434 = vmul.f32 %v294, 0.17677669
    %v435 = vmul.f32 %v300, 0.17677669
    %v436 = vmul.f32 %v306, 0.17677669
    %v437 = vmul.f32 %v312, 0.17677669
    %v438 = vmul.f32 %v318, 0.17677669
    %v439 = vmul.f32 %v324, 0.17677669
    %v440 = vmul.f32 %v330, 0.17677669
    %v441 = vmul.f32 %v336, 0.17677669
    %v442 = vmul.f32 %v342, 0.17677669
    %v443 = vmul.f32 %v348, 0.17677669
    %v444 = vmul.f32 %v354, 0.17677669
    %v445 = vmul.f32 %v360, 0.17677669
    %v446 = vmul.f32 %v366, 0.17677669
    %v447 = vmul.f32 %v372, 0.17677669
    %v448 = vmul.f32 %v378, 0.17677669
    %v449 = vmul.f32 %v384, 0.17677669
    %v450 = vmul.f32 %v390, 0.17677669
    %v451 = vmul.f32 %v396, 0.17677669
    %v452 = vmul.f32 %v402, 0.17677669
    %v453 = vmul.f32 %v408, 0.17677669
    %v454 = vmul.f32 %v414, 0.17677669
    %v455 = vmul.f32 %v420, 0.17677669
    %456 = vst [vmem:[#allocation2] sm:$0xff] %v424
    %457 = vst [vmem:[#allocation2 + $0x8] sm:$0xff] %v425
    %458 = vst [vmem:[#allocation2 + $0x10] sm:$0xff] %v426
    %459 = vst [vmem:[#allocation2 + $0x18] sm:$0xff] %v427
    %460 = vst [vmem:[#allocation2 + $0x20] sm:$0xff] %v428
    %461 = vst [vmem:[#allocation2 + $0x28] sm:$0xff] %v429
    %462 = vst [vmem:[#allocation2 + $0x30] sm:$0xff] %v430
    %463 = vst [vmem:[#allocation2 + $0x38] sm:$0xff] %v431
    %464 = vst [vmem:[#allocation2 + $0x40] sm:$0xff] %v432
    %465 = vst [vmem:[#allocation2 + $0x48] sm:$0xff] %v433
    %466 = vst [vmem:[#allocation2 + $0x50] sm:$0xff] %v434
    %467 = vst [vmem:[#allocation2 + $0x58] sm:$0xff] %v435
    %468 = vst [vmem:[#allocation2 + $0x60] sm:$0xff] %v436
    %469 = vst [vmem:[#allocation2 + $0x68] sm:$0xff] %v437
    %470 = vst [vmem:[#allocation2 + $0x70] sm:$0xff] %v438
    %471 = vst [vmem:[#allocation2 + $0x78] sm:$0xff] %v439
    %472 = vst [vmem:[#allocation2 + $0x80] sm:$0xff] %v440
    %473 = vst [vmem:[#allocation2 + $0x88] sm:$0xff] %v441
    %474 = vst [vmem:[#allocation2 + $0x90] sm:$0xff] %v442
    %475 = vst [vmem:[#allocation2 + $0x98] sm:$0xff] %v443
    %476 = vst [vmem:[#allocation2 + $0xa0] sm:$0xff] %v444
    %477 = vst [vmem:[#allocation2 + $0xa8] sm:$0xff] %v445
    %478 = vst [vmem:[#allocation2 + $0xb0] sm:$0xff] %v446
    %479 = vst [vmem:[#allocation2 + $0xb8] sm:$0xff] %v447
    %480 = vst [vmem:[#allocation2 + $0xc0] sm:$0xff] %v448
    %481 = vst [vmem:[#allocation2 + $0xc8] sm:$0xff] %v449
    %482 = vst [vmem:[#allocation2 + $0xd0] sm:$0xff] %v450
    %483 = vst [vmem:[#allocation2 + $0xd8] sm:$0xff] %v451
    %484 = vst [vmem:[#allocation2 + $0xe0] sm:$0xff] %v452
    %485 = vst [vmem:[#allocation2 + $0xe8] sm:$0xff] %v453
    %486 = vst [vmem:[#allocation2 + $0xf0] sm:$0xff] %v454
    %487 = vst [vmem:[#allocation2 + $0xf8] sm:$0xff] %v455
    %488 = vst [vmem:[#allocation4] sm:$0xff] %v236
    %489 = vst [vmem:[#allocation4 + $0x8] sm:$0xff] %v242
    %490 = vst [vmem:[#allocation4 + $0x10] sm:$0xff] %v248
    %491 = vst [vmem:[#allocation4 + $0x18] sm:$0xff] %v254
    %492 = vst [vmem:[#allocation4 + $0x20] sm:$0xff] %v260
    %493 = vst [vmem:[#allocation4 + $0x28] sm:$0xff] %v266
    %494 = vst [vmem:[#allocation4 + $0x30] sm:$0xff] %v272
    %495 = vst [vmem:[#allocation4 + $0x38] sm:$0xff] %v278
    %496 = vst [vmem:[#allocation4 + $0x40] sm:$0xff] %v284
    %497 = vst [vmem:[#allocation4 + $0x48] sm:$0xff] %v290
    %498 = vst [vmem:[#allocation4 + $0x50] sm:$0xff] %v296
    %499 = vst [vmem:[#allocation4 + $0x58] sm:$0xff] %v302
    %500 = vst [vmem:[#allocation4 + $0x60] sm:$0xff] %v308
    %501 = vst [vmem:[#allocation4 + $0x68] sm:$0xff] %v314
    %502 = vst [vmem:[#allocation4 + $0x70] sm:$0xff] %v320
    %503 = vst [vmem:[#allocation4 + $0x78] sm:$0xff] %v326
    %504 = vst [vmem:[#allocation4 + $0x80] sm:$0xff] %v332
    %505 = vst [vmem:[#allocation4 + $0x88] sm:$0xff] %v338
    %506 = vst [vmem:[#allocation4 + $0x90] sm:$0xff] %v344
    %507 = vst [vmem:[#allocation4 + $0x98] sm:$0xff] %v350
    %508 = vst [vmem:[#allocation4 + $0xa0] sm:$0xff] %v356
    %509 = vst [vmem:[#allocation4 + $0xa8] sm:$0xff] %v362
    %510 = vst [vmem:[#allocation4 + $0xb0] sm:$0xff] %v368
    %511 = vst [vmem:[#allocation4 + $0xb8] sm:$0xff] %v374
    %512 = vst [vmem:[#allocation4 + $0xc0] sm:$0xff] %v380
    %513 = vst [vmem:[#allocation4 + $0xc8] sm:$0xff] %v386
    %514 = vst [vmem:[#allocation4 + $0xd0] sm:$0xff] %v392
    %515 = vst [vmem:[#allocation4 + $0xd8] sm:$0xff] %v398
    %516 = vst [vmem:[#allocation4 + $0xe0] sm:$0xff] %v404
    %517 = vst [vmem:[#allocation4 + $0xe8] sm:$0xff] %v410
    %518 = vst [vmem:[#allocation4 + $0xf0] sm:$0xff] %v416
    %519 = vst [vmem:[#allocation4 + $0xf8] sm:$0xff] %v422
    // Predicated region
    $region14: #{tpu_custom_call.1} parent=1 // pred_check
      _
    $region15: #{tpu_custom_call.1} parent=1 // pred_check_branch
      %521 = sbr.rel (0) target = $region17
    $region16: #{tpu_custom_call.1} parent=1 // pred_region
      %s523 = ssub.s32 4096, 4096
      %524 = vsyncadd [#allocation3], %s523
      %s525 = sshll.u32 [#allocation2], 4
      %s526 = int_to_ptr.vmem [resolvable:$true] %s525
      %531 = dma.vmem_to_hbm [thread:$0]  %s526, 4096, %s3, [#allocation3], 128, 128, 8
    $region17: #{tpu_custom_call.1} parent=1 // pred_fallthru
      _
    // Predicated region
    $region18: #{tpu_custom_call.1} parent=1 // pred_check
      _
    $region19: #{tpu_custom_call.1} parent=1 // pred_check_branch
      %533 = sbr.rel (0) target = $region21
    $region20: #{tpu_custom_call.1} parent=1 // pred_region
      %s535 = ssub.s32 4096, 4096
      %536 = vsyncadd [#allocation5], %s535
      %s537 = sshll.u32 [#allocation4], 4
      %s538 = int_to_ptr.vmem [resolvable:$true] %s537
      %543 = dma.vmem_to_hbm [thread:$0]  %s538, 4096, %s4, [#allocation5], 128, 128, 8
    $region21: #{tpu_custom_call.1} parent=1 // pred_fallthru
      _
    // Predicated region
    $region22: #{tpu_custom_call.1} parent=1 // pred_check
      _
    $region23: #{tpu_custom_call.1} parent=1 // pred_check_branch
      %545 = sbr.rel (0) target = $region25
    $region24: #{tpu_custom_call.1} parent=1 // pred_region
      %546 = dma.done [#allocation3], 4096
    $region25: #{tpu_custom_call.1} parent=1 // pred_fallthru
      _
    // Predicated region
    $region26: #{tpu_custom_call.1} parent=1 // pred_check
      _
    $region27: #{tpu_custom_call.1} parent=1 // pred_check_branch
      %548 = sbr.rel (0) target = $region29
    $region28: #{tpu_custom_call.1} parent=1 // pred_region
      %549 = dma.done [#allocation5], 4096
    $region29: #{tpu_custom_call.1} parent=1 // pred_fallthru
      _
    %550 = vsyncpa [#allocation3], 1
    %551 = vsyncpa [#allocation5], 1

</llo_original>
